<compile_context>
chip_gen: v5e
topology: v5e:2x2
jax: 0.10.0
libtpu: 0.0.40
codegen_flags: <defaults>
</compile_context>

<pallas_src>
import functools
import numbers
from collections.abc import Sequence

import jax
import jax.numpy as jnp
from jax.experimental import pallas as pl
from jax.experimental.pallas import tpu as pltpu


_MIN_PALLAS_OUT_BYTES = 64 * 1024  # below this, jnp.pad (fusable) beats a kernel launch


# ----------------------------- Pallas kernels --------------------------------
def _pad_nchw_kernel(x_ref, o_ref, *, pad_t, pad_b, pad_l, pad_r, H, W, fill):
    """Constant-pad one channel block, layout (bnc, H, W) -> (bnc, H_out, W_out).

    Interior is stored exactly once; only the four border strips are filled.
    """
    bnc, H_out, W_out = o_ref.shape
    dt = o_ref.dtype
    # interior copy (single store of the source block)
    o_ref[:, pad_t:pad_t + H, pad_l:pad_l + W] = x_ref[...]
    # border strips (static Python ifs -> traced only when non-empty)
    if pad_t:
        o_ref[:, :pad_t, :] = jnp.full((bnc, pad_t, W_out), fill, dt)
    if pad_b:
        o_ref[:, pad_t + H:, :] = jnp.full((bnc, pad_b, W_out), fill, dt)
    if pad_l:
        o_ref[:, pad_t:pad_t + H, :pad_l] = jnp.full((bnc, H, pad_l), dt.type(0) + fill if False else fill, dt)
    if pad_r:
        o_ref[:, pad_t:pad_t + H, pad_l + W:] = jnp.full((bnc, H, pad_r), fill, dt)
    # TODO(synk): for sub-32-bit dtypes on v5e a lane-shifted interior store is
    # the worst case for the single vst slot; a pltpu.bitcast 32-bit-container
    # copy (when pad_l*itemsize is 4-byte aligned) could be added here.


def _pad_cl_kernel(x_ref, o_ref, *, pad_t, pad_b, pad_l, pad_r, H, W, fill):
    """Constant-pad, channels-last layout (H, W, bnc) -> (H_out, W_out, bnc).

    Channels live in the 128-lane dim, so every store is full lane width and
    the pad offsets are pure sublane/row offsets (no cross-lane movement).
    """
    H_out, W_out, bnc = o_ref.shape
    dt = o_ref.dtype
    o_ref[pad_t:pad_t + H, pad_l:pad_l + W, :] = x_ref[...]
    if pad_t:
        o_ref[:pad_t, :, :] = jnp.full((pad_t, W_out, bnc), fill, dt)
    if pad_b:
        o_ref[pad_t + H:, :, :] = jnp.full((pad_b, W_out, bnc), fill, dt)
    if pad_l:
        o_ref[pad_t:pad_t + H, :pad_l, :] = jnp.full((H, pad_l, bnc), fill, dt)
    if pad_r:
        o_ref[pad_t:pad_t + H, pad_l + W:, :] = jnp.full((H, pad_r, bnc), fill, dt)


# ----------------------------- helpers ---------------------------------------
def _parse_padding(padding):
    # mirrors torchvision.transforms.functional_tensor._parse_pad_padding
    if isinstance(padding, numbers.Number):
        padding = [int(padding)]
    else:
        padding = [int(p) for p in padding]
    if len(padding) == 1:
        pad_left = pad_right = pad_top = pad_bottom = padding[0]
    elif len(padding) == 2:
        pad_left = pad_right = padding[0]
        pad_top = pad_bottom = padding[1]
    else:
        pad_left, pad_top, pad_right, pad_bottom = padding
    return pad_left, pad_right, pad_top, pad_bottom


def _vmem_budget_and_limit():
    """Generation-aware VMEM budget for the (double-buffered) in+out tiles."""
    try:
        cap = int(pltpu.get_tpu_info().vmem_capacity_bytes)
    except Exception:
        cap = 64 * 1024 * 1024  # conservative default (v7x per-core size)
    if cap <= 64 * 1024 * 1024:
        budget = 24 * 1024 * 1024          # v7x: 64 MiB/TC, both cores need buffers
    else:
        budget = 48 * 1024 * 1024          # v5e/v6e: 128 MiB physical
    vmem_limit = budget + 8 * 1024 * 1024  # tell the compiler we intend to use it
    return budget, vmem_limit


def _compiler_params(vmem_limit):
    return pltpu.CompilerParams(
        dimension_semantics=("parallel",),
        vmem_limit_bytes=int(vmem_limit),
    )


def _pad_nchw(img, pads, fill, budget, vmem_limit):
    pad_l, pad_r, pad_t, pad_b = pads
    N, C, H, W = img.shape
    H_out, W_out = H + pad_t + pad_b, W + pad_l + pad_r
    NC = N * C
    itemsize = jnp.dtype(img.dtype).itemsize
    x = img.reshape(NC, H, W)

    per_c = 2 * (H * W + H_out * W_out) * itemsize  # double-buffered in+out, per channel
    bnc = max(1, min(NC, budget // per_c))
    if NC > 1:
        bnc = min(bnc, pl.cdiv(NC, 2))               # >= 2 grid steps -> both v7x cores busy
    bnc = max(1, NC // pl.cdiv(NC, bnc))             # (nearly) divide NC: no wasted tail DMA
    grid = (pl.cdiv(NC, bnc),)

    out = pl.pallas_call(
        functools.partial(_pad_nchw_kernel, pad_t=pad_t, pad_b=pad_b,
                          pad_l=pad_l, pad_r=pad_r, H=H, W=W, fill=fill),
        out_shape=jax.ShapeDtypeStruct((NC, H_out, W_out), img.dtype),
        grid=grid,
        in_specs=[pl.BlockSpec((bnc, H, W), lambda i: (i, 0, 0))],
        out_specs=pl.BlockSpec((bnc, H_out, W_out), lambda i: (i, 0, 0)),
        compiler_params=_compiler_params(vmem_limit),
    )(x)
    return out.reshape(N, C, H_out, W_out)


def _pad_channels_last(img, pads, fill, budget, vmem_limit):
    pad_l, pad_r, pad_t, pad_b = pads
    N, C, H, W = img.shape
    H_out, W_out = H + pad_t + pad_b, W + pad_l + pad_r
    NC = N * C
    itemsize = jnp.dtype(img.dtype).itemsize

    # NCHW -> (H, W, NC): channels occupy the lane dim (best when the caller can
    # keep a channels-last layout upstream; here the transposes are paid locally).
    x = jnp.transpose(img.reshape(NC, H, W), (1, 2, 0))

    per_c = 2 * (H * W + H_out * W_out) * itemsize
    bnc = min(NC, max(128, budget // per_c))
    bnc = max(128, (bnc // 128) * 128)               # lane-dense: multiple of 128
    if bnc >= NC and NC > 128:
        bnc = 128 * pl.cdiv(pl.cdiv(NC, 2), 128)     # >= 2 grid steps for v7x megacore
    bnc = min(bnc, max(128, 128 * ((NC // pl.cdiv(NC, bnc)) // 128)))
    grid = (pl.cdiv(NC, bnc),)

    out = pl.pallas_call(
        functools.partial(_pad_cl_kernel, pad_t=pad_t, pad_b=pad_b,
                          pad_l=pad_l, pad_r=pad_r, H=H, W=W, fill=fill),
        out_shape=jax.ShapeDtypeStruct((H_out, W_out, NC), img.dtype),
        grid=grid,
        in_specs=[pl.BlockSpec((H, W, bnc), lambda i: (0, 0, i))],
        out_specs=pl.BlockSpec((H_out, W_out, bnc), lambda i: (0, 0, i)),
        compiler_params=_compiler_params(vmem_limit),
    )(x)
    return jnp.transpose(out, (2, 0, 1)).reshape(N, C, H_out, W_out)


# ----------------------------- wrapper ----------------------------------------
def pad_image(img, padding, fill=0, padding_mode="constant"):
    """torchvision-style F.pad on an NCHW tensor ('constant' runs in Pallas)."""
    pad_l, pad_r, pad_t, pad_b = _parse_padding(padding)

    if padding_mode != "constant":
        # TODO(synk): edge/reflect/symmetric modes fall back to jnp.pad (no Pallas kernel).
        mode = {"edge": "edge", "reflect": "reflect", "symmetric": "symmetric"}[padding_mode]
        return jnp.pad(img, ((0, 0), (0, 0), (pad_t, pad_b), (pad_l, pad_r)), mode=mode)

    if min(pad_l, pad_r, pad_t, pad_b) < 0:
        # TODO(synk): negative padding (cropping) is not implemented in the Pallas path.
        raise NotImplementedError("negative padding not supported")
    if not isinstance(fill, numbers.Number):
        # TODO(synk): str / tuple fill values are not supported on the tensor path.
        raise NotImplementedError("only scalar numeric fill is supported")

    # fast path: nothing to do
    if pad_l == pad_r == pad_t == pad_b == 0:
        return img

    N, C, H, W = img.shape
    H_out, W_out = H + pad_t + pad_b, W + pad_l + pad_r
    NC = N * C
    itemsize = jnp.dtype(img.dtype).itemsize
    pads = (pad_l, pad_r, pad_t, pad_b)
    fill_arr = jnp.asarray(fill).astype(img.dtype)

    # tiny tensors: kernel launch + HBM round-trip dominates; let XLA fuse jnp.pad
    if NC * H_out * W_out * itemsize < _MIN_PALLAS_OUT_BYTES:
        return jnp.pad(img, ((0, 0), (0, 0), (pad_t, pad_b), (pad_l, pad_r)),
                       constant_values=fill_arr)

    budget, vmem_limit = _vmem_budget_and_limit()
    per_c = 2 * (H * W + H_out * W_out) * itemsize
    if per_c > budget:
        # TODO(synk): spatial (H) tiling for single images too large for one VMEM block.
        return jnp.pad(img, ((0, 0), (0, 0), (pad_t, pad_b), (pad_l, pad_r)),
                       constant_values=fill_arr)

    # lane-dense channels-last path when the NCHW layout would be lane-starved
    if NC >= 128 and W_out < 128 and 128 * per_c <= budget:
        return _pad_channels_last(img, pads, fill, budget, vmem_limit)
    return _pad_nchw(img, pads, fill, budget, vmem_limit)


class Pad:
    """JAX/Pallas port of the PyTorch Pad module (pads image only, not mask)."""

    def __init__(self, padding, fill=0, padding_mode="constant"):
        if not isinstance(padding, (numbers.Number, tuple, list)):
            raise TypeError("Got inappropriate padding arg")
        if not isinstance(fill, (numbers.Number, str, tuple)):
            raise TypeError("Got inappropriate fill arg")
        if padding_mode not in ["constant", "edge", "reflect", "symmetric"]:
            raise ValueError(
                "Padding mode should be either constant, edge, reflect or symmetric")
        if isinstance(padding, Sequence) and len(padding) not in [1, 2, 4]:
            raise ValueError(
                "Padding must be an int or a 1, 2, or 4 element tuple, not a "
                "{} element tuple".format(len(padding)))
        self.padding = padding
        self.fill = fill
        self.padding_mode = padding_mode

    def __call__(self, image, mask):
        return pad_image(image, self.padding, self.fill, self.padding_mode), mask


# ----------------------------------- main -------------------------------------
if __name__ == "__main__":
    key = jax.random.PRNGKey(0)
    k1, k2, k3, k4 = jax.random.split(key, 4)

    # NCHW inputs, as the PyTorch module expects
    image = jax.random.normal(k1, (2, 16, 32, 32), dtype=jnp.float32)
    mask = (jax.random.uniform(k2, (2, 1, 32, 32)) > 0.5).astype(jnp.float32)

    # --- NCHW Pallas path: symmetric int padding, default zero fill ---
    out_a, mask_a = Pad(padding=2)(image, mask)
    ref_a = jnp.pad(image, ((0, 0), (0, 0), (2, 2), (2, 2)), constant_values=0.0)

    # --- NCHW Pallas path: asymmetric (left=1, top=2, right=3, bottom=4), fill=0.5 ---
    out_b, _ = Pad(padding=(1, 2, 3, 4), fill=0.5)(image, mask)
    ref_b = jnp.pad(image, ((0, 0), (0, 0), (2, 4), (1, 3)), constant_values=0.5)

    # --- NCHW Pallas path with a non-divisible channel grid (partial tail block) ---
    image_c = jax.random.normal(k3, (1, 7, 48, 48), dtype=jnp.float32)
    out_c, _ = Pad(padding=2)(image_c, mask)
    ref_c = jnp.pad(image_c, ((0, 0), (0, 0), (2, 2), (2, 2)))

    # --- lane-dense channels-last Pallas path: NC >= 128, bf16 dtype preserved ---
    image_d = jax.random.normal(k4, (2, 128, 32, 32), dtype=jnp.bfloat16)
    out_d, _ = Pad(padding=3)(image_d, mask)
    ref_d = jnp.pad(image_d, ((0, 0), (0, 0), (3, 3), (3, 3)))

    # --- zero-pad fast path and non-constant mode fallback ---
    out_e, _ = Pad(padding=0)(image, mask)
    out_f, _ = Pad(padding=2, padding_mode="reflect")(image, mask)
    ref_f = jnp.pad(image, ((0, 0), (0, 0), (2, 2), (2, 2)), mode="reflect")

    jax.block_until_ready((out_a, out_b, out_c, out_d, out_e, out_f, mask_a))

    assert out_a.shape == (2, 16, 36, 36) and jnp.array_equal(out_a, ref_a)
    assert out_b.shape == (2, 16, 38, 36) and jnp.array_equal(out_b, ref_b)
    assert out_c.shape == (1, 7, 52, 52) and jnp.array_equal(out_c, ref_c)
    assert out_d.shape == (2, 128, 38, 38) and out_d.dtype == jnp.bfloat16
    assert jnp.array_equal(out_d, ref_d)
    assert out_e.shape == image.shape and jnp.array_equal(out_e, image)
    assert jnp.array_equal(out_f, ref_f)
    assert jnp.array_equal(mask_a, mask)
    assert jnp.all(jnp.isfinite(out_a)) and jnp.all(jnp.isfinite(out_b))

    print("KERNEL_OK")
</pallas_src>

<mosaic_0001>
module attributes {stable_mosaic.version = 11 : i64} {
  func.func @_pad_nchw_kernel(%arg0: i32, %arg1: memref<16x32x32xf32, #tpu.memory_space<vmem>>, %arg2: memref<16x36x36xf32, #tpu.memory_space<vmem>>) attributes {dimension_semantics = [#tpu.dimension_semantics<parallel>], iteration_bounds = array<i64: 2>, scalar_prefetch = 0 : i64, scratch_operands = 0 : i64, tpu.core_type = #tpu.core_type<tc>, window_params = [{transform_indices = @transform_0, window_bounds = array<i64: 16, 32, 32>}, {transform_indices = @transform_1, window_bounds = array<i64: 16, 36, 36>}]} {
    %c0 = arith.constant 0 : index
    %c0_0 = arith.constant 0 : index
    %c0_1 = arith.constant 0 : index
    %0 = vector.load %arg1[%c0, %c0_0, %c0_1] : memref<16x32x32xf32, #tpu.memory_space<vmem>>, vector<16x32x32xf32>
    %c0_2 = arith.constant 0 : index
    %c2 = arith.constant 2 : index
    %c2_3 = arith.constant 2 : index
    %1 = vector.load %arg2[%c0_2, %c2, %c2_3] : memref<16x36x36xf32, #tpu.memory_space<vmem>>, vector<16x32x32xf32>
    tpu.vector_store %arg2[%c0_2, %c2, %c2_3], %0 {strides = array<i32>} : memref<16x36x36xf32, #tpu.memory_space<vmem>>, vector<16x32x32xf32>,
    %cst = arith.constant 0.000000e+00 : f32
    %2 = vector.broadcast %cst : f32 to vector<16x2x36xf32>
    %c0_4 = arith.constant 0 : index
    %c0_5 = arith.constant 0 : index
    %c0_6 = arith.constant 0 : index
    %3 = vector.load %arg2[%c0_4, %c0_5, %c0_6] : memref<16x36x36xf32, #tpu.memory_space<vmem>>, vector<16x2x36xf32>
    tpu.vector_store %arg2[%c0_4, %c0_5, %c0_6], %2 {strides = array<i32>} : memref<16x36x36xf32, #tpu.memory_space<vmem>>, vector<16x2x36xf32>,
    %cst_7 = arith.constant 0.000000e+00 : f32
    %4 = vector.broadcast %cst_7 : f32 to vector<16x2x36xf32>
    %c0_8 = arith.constant 0 : index
    %c34 = arith.constant 34 : index
    %c0_9 = arith.constant 0 : index
    %5 = vector.load %arg2[%c0_8, %c34, %c0_9] : memref<16x36x36xf32, #tpu.memory_space<vmem>>, vector<16x2x36xf32>
    tpu.vector_store %arg2[%c0_8, %c34, %c0_9], %4 {strides = array<i32>} : memref<16x36x36xf32, #tpu.memory_space<vmem>>, vector<16x2x36xf32>,
    %cst_10 = arith.constant 0.000000e+00 : f32
    %6 = vector.broadcast %cst_10 : f32 to vector<16x32x2xf32>
    %c0_11 = arith.constant 0 : index
    %c2_12 = arith.constant 2 : index
    %c0_13 = arith.constant 0 : index
    %7 = vector.load %arg2[%c0_11, %c2_12, %c0_13] : memref<16x36x36xf32, #tpu.memory_space<vmem>>, vector<16x32x2xf32>
    tpu.vector_store %arg2[%c0_11, %c2_12, %c0_13], %6 {strides = array<i32>} : memref<16x36x36xf32, #tpu.memory_space<vmem>>, vector<16x32x2xf32>,
    %cst_14 = arith.constant 0.000000e+00 : f32
    %8 = vector.broadcast %cst_14 : f32 to vector<16x32x2xf32>
    %c0_15 = arith.constant 0 : index
    %c2_16 = arith.constant 2 : index
    %c34_17 = arith.constant 34 : index
    %9 = vector.load %arg2[%c0_15, %c2_16, %c34_17] : memref<16x36x36xf32, #tpu.memory_space<vmem>>, vector<16x32x2xf32>
    tpu.vector_store %arg2[%c0_15, %c2_16, %c34_17], %8 {strides = array<i32>} : memref<16x36x36xf32, #tpu.memory_space<vmem>>, vector<16x32x2xf32>,
    return
  }
  func.func @transform_0(%arg0: i32) -> (i32, i32, i32) {
    %c0_i32 = arith.constant 0 : i32
    %c0_i32_0 = arith.constant 0 : i32
    %c0_i32_1 = arith.constant 0 : i32
    return %arg0, %c0_i32, %c0_i32_0 : i32, i32, i32
  }
  func.func @transform_1(%arg0: i32) -> (i32, i32, i32) {
    %c0_i32 = arith.constant 0 : i32
    %c0_i32_0 = arith.constant 0 : i32
    %c0_i32_1 = arith.constant 0 : i32
    return %arg0, %c0_i32, %c0_i32_0 : i32, i32, i32
  }
}

</mosaic_0001>

<llo_original>
// kernel: tpu_custom_call.1
$region0: #{tpu_custom_call.1}
  #allocation0 [shape = 'u32[]', space=smem, size = 0x4, offset = 0x4, fixed_abs, tag = 'smem constant byte address 0x4 - core index']
  #allocation1 [shape = 'u32[72,128]{1,0:T(1,128)}', space=vmem, size = 0x9000, scoped, tag = 'internal scratch']
  %s0 = inlined_call_operand.hbm [shape: f32[32,32,32], index: 0, kind: input, shape index: {}]
  %s1 = inlined_call_operand.vmem [shape: f32[32,36,36], index: 1, kind: output, shape index: {}]
  %s2 = sld [smem:[#allocation0]]
  $region41: #{tpu_custom_call.1} parent=0
    _
  %s4 = ssub.s32 1, %s2
  %s5 = scalar_select 0, %s4, %s2
  $region1: #{tpu_custom_call.1} parent=0
    #allocation2 [shape = 'u8[524288]{0}', space=vmem, size = 0x80000, scoped, tag = 'input window, operand 0']
    #allocation3 [shape = 's32[2]{0}', space=sflag, size = 0x8, scoped, tag = 'scoped memory for tpu_custom_call.1']
    %6 = vsyncpa [#allocation3], 0
    %s7 = scalar_lea.sflag [#allocation3], 1
    %8 = vsyncpa %s7, 0
    loop: start=0, step=1, limit=4
    $region2: #{tpu_custom_call.1} parent=1 // loop_pre_header
      _
    $region3: #{tpu_custom_call.1} parent=1 // loop_header
      %s10 = sphi 0, %s14
      %p11 = scmp.ge.s32.totalorder %s10, 4
      %s20 = sphi 0, %s22
      %s23 = sphi 0, %s20
      %s24 = sphi 0, %s23
      %s40 = sphi 0, %s24
      %s46 = sphi 0, %s48
      %s49 = sphi 0, %s46
      %s50 = sphi 0, %s49
      %s66 = sphi 0, %s50
    $region4: #{tpu_custom_call.1} parent=1 // loop_header_branch
      %13 = sbr.rel (%p11) target = $region8
    $region5: #{tpu_custom_call.1} parent=1 // loop_body
      %s15 = ssub.s32 %s10, 1
      %s16 = ssub.s32 %s10, 2
      %s17 = sadd.s32 %s10, 1
      %s18 = ssub.s32 %s10, %s17
      %p19 = scmp.eq.s32.totalorder %s18, 0
      %s21 = sadd.s32 %s20, 1
      %s22 = scalar_select %p19, %s20, %s21
      %p25 = pneg %p19
      %p26 = scmp.eq.s32.totalorder %s10, 1
      %p27 = por %p25, %p26
      %p28 = scmp.ne.s32.totalorder %s20, %s23
      %p29 = scmp.eq.s32.totalorder %s10, 0
      %p30 = por %p28, %p29
      %p31 = scmp.ne.s32.totalorder %s20, %s23
      %p32 = scmp.eq.s32.totalorder %s15, 1
      %p33 = por %p31, %p32
      %p34 = scmp.ne.s32.totalorder %s23, %s24
      %p35 = scmp.eq.s32.totalorder %s15, 0
      %p36 = por %p34, %p35
      %p37 = scmp.ne.s32.totalorder %s23, %s24
      %p38 = scmp.eq.s32.totalorder %s16, 1
      %p39 = por %p37, %p38
      %p41 = scmp.ne.s32.totalorder %s24, %s40
      %p42 = scmp.eq.s32.totalorder %s16, 0
      %p43 = por %p41, %p42
      %s44 = ssub.s32 %s10, %s17
      %p45 = scmp.eq.s32.totalorder %s44, 0
      %s47 = sadd.s32 %s46, 1
      %s48 = scalar_select %p45, %s46, %s47
      %p51 = pneg %p45
      %p52 = scmp.eq.s32.totalorder %s10, 1
      %p53 = por %p51, %p52
      %p54 = scmp.ne.s32.totalorder %s46, %s49
      %p55 = scmp.eq.s32.totalorder %s10, 0
      %p56 = por %p54, %p55
      %p57 = scmp.ne.s32.totalorder %s46, %s49
      %p58 = scmp.eq.s32.totalorder %s15, 1
      %p59 = por %p57, %p58
      %p60 = scmp.ne.s32.totalorder %s49, %s50
      %p61 = scmp.eq.s32.totalorder %s15, 0
      %p62 = por %p60, %p61
      %p63 = scmp.ne.s32.totalorder %s49, %s50
      %p64 = scmp.eq.s32.totalorder %s16, 1
      %p65 = por %p63, %p64
      %p67 = scmp.ne.s32.totalorder %s50, %s66
      %p68 = scmp.eq.s32.totalorder %s16, 0
      %p69 = por %p67, %p68
      %p70 = scmp.le.s32.totalorder 1, %s10
      %p71 = scmp.lt.s32.totalorder %s10, 3
      %p72 = pnand %p70, %p71
      %p73 = pneg %p72
      // Predicated region
      $region9: #{tpu_custom_call.1} parent=5 // pred_check
        _
      $region10: #{tpu_custom_call.1} parent=5 // pred_check_branch
        %75 = sbr.rel (%p72) target = $region12
      $region11: #{tpu_custom_call.1} parent=5 // pred_region
        %s76 = ssub.s32 %s10, 1
      $region12: #{tpu_custom_call.1} parent=5 // pred_fallthru
        _
      %p77 = scmp.lt.s32.totalorder %s10, 2
      // Predicated region
      $region13: #{tpu_custom_call.1} parent=5 // pred_check
        %p78 = pneg %p77
      $region14: #{tpu_custom_call.1} parent=5 // pred_check_branch
        %80 = sbr.rel (%p78) target = $region16
      $region15: #{tpu_custom_call.1} parent=5 // pred_region
        // Predicated region
        $region17: #{tpu_custom_call.1} parent=15 // pred_check
          %p81 = pneg %p30
        $region18: #{tpu_custom_call.1} parent=15 // pred_check_branch
          %83 = sbr.rel (%p81) target = $region20
        $region19: #{tpu_custom_call.1} parent=15 // pred_region
          %s84 = sand.u32 %s20, 1
          %s85 = scalar_lea.sflag [#allocation3], %s84
          %s86 = sand.u32 %s20, 1
          %s87 = smul.addr %s86, 512
          %s88 = scalar_lea.vmem [#allocation2], %s87
          %s89 = smul.u32 16, %s10
          %91 = vsyncadd %s85, 0
          %s92 = smul.addr %s89, 4
          %s93 = smul.addr %s92, 8
          %s94 = scalar_lea.hbm %s0, %s93
          %s95 = sshll.u32 %s94, 4
          %s96 = int_to_ptr.hbm [resolvable:$true] %s95
          %s97 = sshll.u32 %s88, 4
          %s98 = int_to_ptr.vmem [resolvable:$true] %s97
          %103 = dma.hbm_to_vmem [thread:$0]  %s96, 8192, %s98, %s85, 128, 128, 8
        $region20: #{tpu_custom_call.1} parent=15 // pred_fallthru
          _
      $region16: #{tpu_custom_call.1} parent=5 // pred_fallthru
        _
      %p104 = scmp.le.s32.totalorder 1, %s10
      %p105 = scmp.lt.s32.totalorder %s10, 3
      %p106 = pnand %p104, %p105
      %p107 = pneg %p106
      // Predicated region
      $region21: #{tpu_custom_call.1} parent=5 // pred_check
        _
      $region22: #{tpu_custom_call.1} parent=5 // pred_check_branch
        %109 = sbr.rel (%p106) target = $region24
      $region23: #{tpu_custom_call.1} parent=5 // pred_region
        %s110 = ssub.s32 %s10, 1
        %s111 = sand.u32 %s23, 1
        %s112 = scalar_lea.sflag [#allocation3], %s111
        %s113 = sand.u32 %s23, 1
        %s114 = smul.addr %s113, 512
        %s115 = scalar_lea.vmem [#allocation2], %s114
        // Predicated region
        $region25: #{tpu_custom_call.1} parent=23 // pred_check
          %p116 = pneg %p36
        $region26: #{tpu_custom_call.1} parent=23 // pred_check_branch
          %118 = sbr.rel (%p116) target = $region28
        $region27: #{tpu_custom_call.1} parent=23 // pred_region
          %120 = dma.done %s112, 8192
        $region28: #{tpu_custom_call.1} parent=23 // pred_fallthru
          _
        %s121 = sand.u32 %s23, 1
        %s122 = scalar_lea.sflag [#allocation3], %s121
        %s123 = sand.u32 %s23, 1
        %s124 = smul.addr %s123, 512
        %s125 = scalar_lea.vmem [#allocation2], %s124
        %p126 = pneg %p36
        %p127 = pneg %p33
        %p128 = pneg %p62
        %p129 = pneg %p59
        %s130 = smul.u32 16, %s15
        %p131 = scmp.lt.s32.totalorder %s130, 31
        %s132 = scalar_select %p131, %s130, 31
        %s133 = smul.addr %s132, 5
        %s134 = smul.addr %s133, 8
        %s135 = scalar_lea.vmem %s1, %s134
        %s136 = smul.u32 16, %s15
        %s137 = smul.u32 16, %s15
        %p138 = scmp.lt.s32.totalorder %s137, 31
        %s139 = scalar_select %p138, %s137, 31
        %s140 = smul.addr %s139, 5
        %s141 = smul.addr %s140, 8
        %s142 = scalar_lea.vmem %s1, %s141
        %s143 = smul.u32 16, %s15
        %v144 = vld [vmem:[%s115] sm:$0xff]
        %v145 = vld [vmem:[%s115 + $0x8] sm:$0xff]
        %v146 = vld [vmem:[%s115 + $0x10] sm:$0xff]
        %v147 = vld [vmem:[%s115 + $0x18] sm:$0xff]
        %v148 = vld [vmem:[%s115 + $0x20] sm:$0xff]
        %v149 = vld [vmem:[%s115 + $0x28] sm:$0xff]
        %v150 = vld [vmem:[%s115 + $0x30] sm:$0xff]
        %v151 = vld [vmem:[%s115 + $0x38] sm:$0xff]
        %v152 = vld [vmem:[%s115 + $0x40] sm:$0xff]
        %v153 = vld [vmem:[%s115 + $0x48] sm:$0xff]
        %v154 = vld [vmem:[%s115 + $0x50] sm:$0xff]
        %v155 = vld [vmem:[%s115 + $0x58] sm:$0xff]
        %v156 = vld [vmem:[%s115 + $0x60] sm:$0xff]
        %v157 = vld [vmem:[%s115 + $0x68] sm:$0xff]
        %v158 = vld [vmem:[%s115 + $0x70] sm:$0xff]
        %v159 = vld [vmem:[%s115 + $0x78] sm:$0xff]
        %v160 = vld [vmem:[%s115 + $0x80] sm:$0xff]
        %v161 = vld [vmem:[%s115 + $0x88] sm:$0xff]
        %v162 = vld [vmem:[%s115 + $0x90] sm:$0xff]
        %v163 = vld [vmem:[%s115 + $0x98] sm:$0xff]
        %v164 = vld [vmem:[%s115 + $0xa0] sm:$0xff]
        %v165 = vld [vmem:[%s115 + $0xa8] sm:$0xff]
        %v166 = vld [vmem:[%s115 + $0xb0] sm:$0xff]
        %v167 = vld [vmem:[%s115 + $0xb8] sm:$0xff]
        %v168 = vld [vmem:[%s115 + $0xc0] sm:$0xff]
        %v169 = vld [vmem:[%s115 + $0xc8] sm:$0xff]
        %v170 = vld [vmem:[%s115 + $0xd0] sm:$0xff]
        %v171 = vld [vmem:[%s115 + $0xd8] sm:$0xff]
        %v172 = vld [vmem:[%s115 + $0xe0] sm:$0xff]
        %v173 = vld [vmem:[%s115 + $0xe8] sm:$0xff]
        %v174 = vld [vmem:[%s115 + $0xf0] sm:$0xff]
        %v175 = vld [vmem:[%s115 + $0xf8] sm:$0xff]
        %v176 = vld [vmem:[%s115 + $0x100] sm:$0xff]
        %v177 = vld [vmem:[%s115 + $0x108] sm:$0xff]
        %v178 = vld [vmem:[%s115 + $0x110] sm:$0xff]
        %v179 = vld [vmem:[%s115 + $0x118] sm:$0xff]
        %v180 = vld [vmem:[%s115 + $0x120] sm:$0xff]
        %v181 = vld [vmem:[%s115 + $0x128] sm:$0xff]
        %v182 = vld [vmem:[%s115 + $0x130] sm:$0xff]
        %v183 = vld [vmem:[%s115 + $0x138] sm:$0xff]
        %v184 = vld [vmem:[%s115 + $0x140] sm:$0xff]
        %v185 = vld [vmem:[%s115 + $0x148] sm:$0xff]
        %v186 = vld [vmem:[%s115 + $0x150] sm:$0xff]
        %v187 = vld [vmem:[%s115 + $0x158] sm:$0xff]
        %v188 = vld [vmem:[%s115 + $0x160] sm:$0xff]
        %v189 = vld [vmem:[%s115 + $0x168] sm:$0xff]
        %v190 = vld [vmem:[%s115 + $0x170] sm:$0xff]
        %v191 = vld [vmem:[%s115 + $0x178] sm:$0xff]
        %v192 = vld [vmem:[%s115 + $0x180] sm:$0xff]
        %v193 = vld [vmem:[%s115 + $0x188] sm:$0xff]
        %v194 = vld [vmem:[%s115 + $0x190] sm:$0xff]
        %v195 = vld [vmem:[%s115 + $0x198] sm:$0xff]
        %v196 = vld [vmem:[%s115 + $0x1a0] sm:$0xff]
        %v197 = vld [vmem:[%s115 + $0x1a8] sm:$0xff]
        %v198 = vld [vmem:[%s115 + $0x1b0] sm:$0xff]
        %v199 = vld [vmem:[%s115 + $0x1b8] sm:$0xff]
        %v200 = vld [vmem:[%s115 + $0x1c0] sm:$0xff]
        %v201 = vld [vmem:[%s115 + $0x1c8] sm:$0xff]
        %v202 = vld [vmem:[%s115 + $0x1d0] sm:$0xff]
        %v203 = vld [vmem:[%s115 + $0x1d8] sm:$0xff]
        %v204 = vld [vmem:[%s115 + $0x1e0] sm:$0xff]
        %v205 = vld [vmem:[%s115 + $0x1e8] sm:$0xff]
        %v206 = vld [vmem:[%s115 + $0x1f0] sm:$0xff]
        %v207 = vld [vmem:[%s115 + $0x1f8] sm:$0xff]
        %272 = vrot.lane.b32.xlu0 %v144, 2
        %v273 = vpop.permute.xlu0 %272
        %274 = vrot.lane.b32.xlu0 %v145, 2
        %v275 = vpop.permute.xlu0 %274
        %276 = vrot.lane.b32.xlu0 %v146, 2
        %v277 = vpop.permute.xlu0 %276
        %278 = vrot.lane.b32.xlu0 %v147, 2
        %v279 = vpop.permute.xlu0 %278
        %280 = vrot.lane.b32.xlu0 %v148, 2
        %v281 = vpop.permute.xlu0 %280
        %282 = vrot.lane.b32.xlu0 %v149, 2
        %v283 = vpop.permute.xlu0 %282
        %284 = vrot.lane.b32.xlu0 %v150, 2
        %v285 = vpop.permute.xlu0 %284
        %286 = vrot.lane.b32.xlu0 %v151, 2
        %v287 = vpop.permute.xlu0 %286
        %288 = vrot.lane.b32.xlu0 %v152, 2
        %v289 = vpop.permute.xlu0 %288
        %290 = vrot.lane.b32.xlu0 %v153, 2
        %v291 = vpop.permute.xlu0 %290
        %292 = vrot.lane.b32.xlu0 %v154, 2
        %v293 = vpop.permute.xlu0 %292
        %294 = vrot.lane.b32.xlu0 %v155, 2
        %v295 = vpop.permute.xlu0 %294
        %296 = vrot.lane.b32.xlu0 %v156, 2
        %v297 = vpop.permute.xlu0 %296
        %298 = vrot.lane.b32.xlu0 %v157, 2
        %v299 = vpop.permute.xlu0 %298
        %300 = vrot.lane.b32.xlu0 %v158, 2
        %v301 = vpop.permute.xlu0 %300
        %302 = vrot.lane.b32.xlu0 %v159, 2
        %v303 = vpop.permute.xlu0 %302
        %304 = vrot.lane.b32.xlu0 %v160, 2
        %v305 = vpop.permute.xlu0 %304
        %306 = vrot.lane.b32.xlu0 %v161, 2
        %v307 = vpop.permute.xlu0 %306
        %308 = vrot.lane.b32.xlu0 %v162, 2
        %v309 = vpop.permute.xlu0 %308
        %310 = vrot.lane.b32.xlu0 %v163, 2
        %v311 = vpop.permute.xlu0 %310
        %312 = vrot.lane.b32.xlu0 %v164, 2
        %v313 = vpop.permute.xlu0 %312
        %314 = vrot.lane.b32.xlu0 %v165, 2
        %v315 = vpop.permute.xlu0 %314
        %316 = vrot.lane.b32.xlu0 %v166, 2
        %v317 = vpop.permute.xlu0 %316
        %318 = vrot.lane.b32.xlu0 %v167, 2
        %v319 = vpop.permute.xlu0 %318
        %320 = vrot.lane.b32.xlu0 %v168, 2
        %v321 = vpop.permute.xlu0 %320
        %322 = vrot.lane.b32.xlu0 %v169, 2
        %v323 = vpop.permute.xlu0 %322
        %324 = vrot.lane.b32.xlu0 %v170, 2
        %v325 = vpop.permute.xlu0 %324
        %326 = vrot.lane.b32.xlu0 %v171, 2
        %v327 = vpop.permute.xlu0 %326
        %328 = vrot.lane.b32.xlu0 %v172, 2
        %v329 = vpop.permute.xlu0 %328
        %330 = vrot.lane.b32.xlu0 %v173, 2
        %v331 = vpop.permute.xlu0 %330
        %332 = vrot.lane.b32.xlu0 %v174, 2
        %v333 = vpop.permute.xlu0 %332
        %334 = vrot.lane.b32.xlu0 %v175, 2
        %v335 = vpop.permute.xlu0 %334
        %336 = vrot.lane.b32.xlu0 %v176, 2
        %v337 = vpop.permute.xlu0 %336
        %338 = vrot.lane.b32.xlu0 %v177, 2
        %v339 = vpop.permute.xlu0 %338
        %340 = vrot.lane.b32.xlu0 %v178, 2
        %v341 = vpop.permute.xlu0 %340
        %342 = vrot.lane.b32.xlu0 %v179, 2
        %v343 = vpop.permute.xlu0 %342
        %344 = vrot.lane.b32.xlu0 %v180, 2
        %v345 = vpop.permute.xlu0 %344
        %346 = vrot.lane.b32.xlu0 %v181, 2
        %v347 = vpop.permute.xlu0 %346
        %348 = vrot.lane.b32.xlu0 %v182, 2
        %v349 = vpop.permute.xlu0 %348
        %350 = vrot.lane.b32.xlu0 %v183, 2
        %v351 = vpop.permute.xlu0 %350
        %352 = vrot.lane.b32.xlu0 %v184, 2
        %v353 = vpop.permute.xlu0 %352
        %354 = vrot.lane.b32.xlu0 %v185, 2
        %v355 = vpop.permute.xlu0 %354
        %356 = vrot.lane.b32.xlu0 %v186, 2
        %v357 = vpop.permute.xlu0 %356
        %358 = vrot.lane.b32.xlu0 %v187, 2
        %v359 = vpop.permute.xlu0 %358
        %360 = vrot.lane.b32.xlu0 %v188, 2
        %v361 = vpop.permute.xlu0 %360
        %362 = vrot.lane.b32.xlu0 %v189, 2
        %v363 = vpop.permute.xlu0 %362
        %364 = vrot.lane.b32.xlu0 %v190, 2
        %v365 = vpop.permute.xlu0 %364
        %366 = vrot.lane.b32.xlu0 %v191, 2
        %v367 = vpop.permute.xlu0 %366
        %368 = vrot.lane.b32.xlu0 %v192, 2
        %v369 = vpop.permute.xlu0 %368
        %370 = vrot.lane.b32.xlu0 %v193, 2
        %v371 = vpop.permute.xlu0 %370
        %372 = vrot.lane.b32.xlu0 %v194, 2
        %v373 = vpop.permute.xlu0 %372
        %374 = vrot.lane.b32.xlu0 %v195, 2
        %v375 = vpop.permute.xlu0 %374
        %376 = vrot.lane.b32.xlu0 %v196, 2
        %v377 = vpop.permute.xlu0 %376
        %378 = vrot.lane.b32.xlu0 %v197, 2
        %v379 = vpop.permute.xlu0 %378
        %380 = vrot.lane.b32.xlu0 %v198, 2
        %v381 = vpop.permute.xlu0 %380
        %382 = vrot.lane.b32.xlu0 %v199, 2
        %v383 = vpop.permute.xlu0 %382
        %384 = vrot.lane.b32.xlu0 %v200, 2
        %v385 = vpop.permute.xlu0 %384
        %386 = vrot.lane.b32.xlu0 %v201, 2
        %v387 = vpop.permute.xlu0 %386
        %388 = vrot.lane.b32.xlu0 %v202, 2
        %v389 = vpop.permute.xlu0 %388
        %390 = vrot.lane.b32.xlu0 %v203, 2
        %v391 = vpop.permute.xlu0 %390
        %392 = vrot.lane.b32.xlu0 %v204, 2
        %v393 = vpop.permute.xlu0 %392
        %394 = vrot.lane.b32.xlu0 %v205, 2
        %v395 = vpop.permute.xlu0 %394
        %396 = vrot.lane.b32.xlu0 %v206, 2
        %v397 = vpop.permute.xlu0 %396
        %398 = vrot.lane.b32.xlu0 %v207, 2
        %v399 = vpop.permute.xlu0 %398
        %vm464 = vcmask 277520
        %465 = vst.msk [vmem:[%s142 + $0x2] sm:$0xff] %vm464, %v273
        %466 = vst.msk [vmem:[%s142 + $0xa] sm:$0xff] %vm464, %v275
        %467 = vst.msk [vmem:[%s142 + $0x12] sm:$0xff] %vm464, %v277
        %468 = vst.msk [vmem:[%s142 + $0x1a] sm:$0xff] %vm464, %v279
        %469 = vst.msk [vmem:[%s142 + $0x2a] sm:$0xff] %vm464, %v281
        %470 = vst.msk [vmem:[%s142 + $0x32] sm:$0xff] %vm464, %v283
        %471 = vst.msk [vmem:[%s142 + $0x3a] sm:$0xff] %vm464, %v285
        %472 = vst.msk [vmem:[%s142 + $0x42] sm:$0xff] %vm464, %v287
        %473 = vst.msk [vmem:[%s142 + $0x52] sm:$0xff] %vm464, %v289
        %474 = vst.msk [vmem:[%s142 + $0x5a] sm:$0xff] %vm464, %v291
        %475 = vst.msk [vmem:[%s142 + $0x62] sm:$0xff] %vm464, %v293
        %476 = vst.msk [vmem:[%s142 + $0x6a] sm:$0xff] %vm464, %v295
        %477 = vst.msk [vmem:[%s142 + $0x7a] sm:$0xff] %vm464, %v297
        %478 = vst.msk [vmem:[%s142 + $0x82] sm:$0xff] %vm464, %v299
        %479 = vst.msk [vmem:[%s142 + $0x8a] sm:$0xff] %vm464, %v301
        %480 = vst.msk [vmem:[%s142 + $0x92] sm:$0xff] %vm464, %v303
        %481 = vst.msk [vmem:[%s142 + $0xa2] sm:$0xff] %vm464, %v305
        %482 = vst.msk [vmem:[%s142 + $0xaa] sm:$0xff] %vm464, %v307
        %483 = vst.msk [vmem:[%s142 + $0xb2] sm:$0xff] %vm464, %v309
        %484 = vst.msk [vmem:[%s142 + $0xba] sm:$0xff] %vm464, %v311
        %485 = vst.msk [vmem:[%s142 + $0xca] sm:$0xff] %vm464, %v313
        %486 = vst.msk [vmem:[%s142 + $0xd2] sm:$0xff] %vm464, %v315
        %487 = vst.msk [vmem:[%s142 + $0xda] sm:$0xff] %vm464, %v317
        %488 = vst.msk [vmem:[%s142 + $0xe2] sm:$0xff] %vm464, %v319
        %489 = vst.msk [vmem:[%s142 + $0xf2] sm:$0xff] %vm464, %v321
        %490 = vst.msk [vmem:[%s142 + $0xfa] sm:$0xff] %vm464, %v323
        %491 = vst.msk [vmem:[%s142 + $0x102] sm:$0xff] %vm464, %v325
        %492 = vst.msk [vmem:[%s142 + $0x10a] sm:$0xff] %vm464, %v327
        %493 = vst.msk [vmem:[%s142 + $0x11a] sm:$0xff] %vm464, %v329
        %494 = vst.msk [vmem:[%s142 + $0x122] sm:$0xff] %vm464, %v331
        %495 = vst.msk [vmem:[%s142 + $0x12a] sm:$0xff] %vm464, %v333
        %496 = vst.msk [vmem:[%s142 + $0x132] sm:$0xff] %vm464, %v335
        %497 = vst.msk [vmem:[%s142 + $0x142] sm:$0xff] %vm464, %v337
        %498 = vst.msk [vmem:[%s142 + $0x14a] sm:$0xff] %vm464, %v339
        %499 = vst.msk [vmem:[%s142 + $0x152] sm:$0xff] %vm464, %v341
        %500 = vst.msk [vmem:[%s142 + $0x15a] sm:$0xff] %vm464, %v343
        %501 = vst.msk [vmem:[%s142 + $0x16a] sm:$0xff] %vm464, %v345
        %502 = vst.msk [vmem:[%s142 + $0x172] sm:$0xff] %vm464, %v347
        %503 = vst.msk [vmem:[%s142 + $0x17a] sm:$0xff] %vm464, %v349
        %504 = vst.msk [vmem:[%s142 + $0x182] sm:$0xff] %vm464, %v351
        %505 = vst.msk [vmem:[%s142 + $0x192] sm:$0xff] %vm464, %v353
        %506 = vst.msk [vmem:[%s142 + $0x19a] sm:$0xff] %vm464, %v355
        %507 = vst.msk [vmem:[%s142 + $0x1a2] sm:$0xff] %vm464, %v357
        %508 = vst.msk [vmem:[%s142 + $0x1aa] sm:$0xff] %vm464, %v359
        %509 = vst.msk [vmem:[%s142 + $0x1ba] sm:$0xff] %vm464, %v361
        %510 = vst.msk [vmem:[%s142 + $0x1c2] sm:$0xff] %vm464, %v363
        %511 = vst.msk [vmem:[%s142 + $0x1ca] sm:$0xff] %vm464, %v365
        %512 = vst.msk [vmem:[%s142 + $0x1d2] sm:$0xff] %vm464, %v367
        %513 = vst.msk [vmem:[%s142 + $0x1e2] sm:$0xff] %vm464, %v369
        %514 = vst.msk [vmem:[%s142 + $0x1ea] sm:$0xff] %vm464, %v371
        %515 = vst.msk [vmem:[%s142 + $0x1f2] sm:$0xff] %vm464, %v373
        %516 = vst.msk [vmem:[%s142 + $0x1fa] sm:$0xff] %vm464, %v375
        %517 = vst.msk [vmem:[%s142 + $0x20a] sm:$0xff] %vm464, %v377
        %518 = vst.msk [vmem:[%s142 + $0x212] sm:$0xff] %vm464, %v379
        %519 = vst.msk [vmem:[%s142 + $0x21a] sm:$0xff] %vm464, %v381
        %520 = vst.msk [vmem:[%s142 + $0x222] sm:$0xff] %vm464, %v383
        %521 = vst.msk [vmem:[%s142 + $0x232] sm:$0xff] %vm464, %v385
        %522 = vst.msk [vmem:[%s142 + $0x23a] sm:$0xff] %vm464, %v387
        %523 = vst.msk [vmem:[%s142 + $0x242] sm:$0xff] %vm464, %v389
        %524 = vst.msk [vmem:[%s142 + $0x24a] sm:$0xff] %vm464, %v391
        %525 = vst.msk [vmem:[%s142 + $0x25a] sm:$0xff] %vm464, %v393
        %526 = vst.msk [vmem:[%s142 + $0x262] sm:$0xff] %vm464, %v395
        %527 = vst.msk [vmem:[%s142 + $0x26a] sm:$0xff] %vm464, %v397
        %528 = vst.msk [vmem:[%s142 + $0x272] sm:$0xff] %vm464, %v399
        %vm529 = vcmask 287744
        %530 = vst.msk [vmem:[%s142] sm:$0x3] %vm529, 0.0
        %531 = vst.msk [vmem:[%s142 + $0x28] sm:$0x3] %vm529, 0.0
        %532 = vst.msk [vmem:[%s142 + $0x50] sm:$0x3] %vm529, 0.0
        %533 = vst.msk [vmem:[%s142 + $0x78] sm:$0x3] %vm529, 0.0
        %534 = vst.msk [vmem:[%s142 + $0xa0] sm:$0x3] %vm529, 0.0
        %535 = vst.msk [vmem:[%s142 + $0xc8] sm:$0x3] %vm529, 0.0
        %536 = vst.msk [vmem:[%s142 + $0xf0] sm:$0x3] %vm529, 0.0
        %537 = vst.msk [vmem:[%s142 + $0x118] sm:$0x3] %vm529, 0.0
        %538 = vst.msk [vmem:[%s142 + $0x140] sm:$0x3] %vm529, 0.0
        %539 = vst.msk [vmem:[%s142 + $0x168] sm:$0x3] %vm529, 0.0
        %540 = vst.msk [vmem:[%s142 + $0x190] sm:$0x3] %vm529, 0.0
        %541 = vst.msk [vmem:[%s142 + $0x1b8] sm:$0x3] %vm529, 0.0
        %542 = vst.msk [vmem:[%s142 + $0x1e0] sm:$0x3] %vm529, 0.0
        %543 = vst.msk [vmem:[%s142 + $0x208] sm:$0x3] %vm529, 0.0
        %544 = vst.msk [vmem:[%s142 + $0x230] sm:$0x3] %vm529, 0.0
        %545 = vst.msk [vmem:[%s142 + $0x258] sm:$0x3] %vm529, 0.0
        %546 = vst.msk [vmem:[%s142 + $0x22] sm:$0x3] %vm529, 0.0
        %547 = vst.msk [vmem:[%s142 + $0x4a] sm:$0x3] %vm529, 0.0
        %548 = vst.msk [vmem:[%s142 + $0x72] sm:$0x3] %vm529, 0.0
        %549 = vst.msk [vmem:[%s142 + $0x9a] sm:$0x3] %vm529, 0.0
        %550 = vst.msk [vmem:[%s142 + $0xc2] sm:$0x3] %vm529, 0.0
        %551 = vst.msk [vmem:[%s142 + $0xea] sm:$0x3] %vm529, 0.0
        %552 = vst.msk [vmem:[%s142 + $0x112] sm:$0x3] %vm529, 0.0
        %553 = vst.msk [vmem:[%s142 + $0x13a] sm:$0x3] %vm529, 0.0
        %554 = vst.msk [vmem:[%s142 + $0x162] sm:$0x3] %vm529, 0.0
        %555 = vst.msk [vmem:[%s142 + $0x18a] sm:$0x3] %vm529, 0.0
        %556 = vst.msk [vmem:[%s142 + $0x1b2] sm:$0x3] %vm529, 0.0
        %557 = vst.msk [vmem:[%s142 + $0x1da] sm:$0x3] %vm529, 0.0
        %558 = vst.msk [vmem:[%s142 + $0x202] sm:$0x3] %vm529, 0.0
        %559 = vst.msk [vmem:[%s142 + $0x22a] sm:$0x3] %vm529, 0.0
        %560 = vst.msk [vmem:[%s142 + $0x252] sm:$0x3] %vm529, 0.0
        %561 = vst.msk [vmem:[%s142 + $0x27a] sm:$0x3] %vm529, 0.0
        %vm562 = vcmask 15360
        %563 = vst.msk [vmem:[%s142 + $0x2] sm:$0xff] %vm562, 0.0
        %564 = vst.msk [vmem:[%s142 + $0xa] sm:$0xff] %vm562, 0.0
        %565 = vst.msk [vmem:[%s142 + $0x12] sm:$0xff] %vm562, 0.0
        %566 = vst.msk [vmem:[%s142 + $0x1a] sm:$0xff] %vm562, 0.0
        %567 = vst.msk [vmem:[%s142 + $0x2a] sm:$0xff] %vm562, 0.0
        %568 = vst.msk [vmem:[%s142 + $0x32] sm:$0xff] %vm562, 0.0
        %569 = vst.msk [vmem:[%s142 + $0x3a] sm:$0xff] %vm562, 0.0
        %570 = vst.msk [vmem:[%s142 + $0x42] sm:$0xff] %vm562, 0.0
        %571 = vst.msk [vmem:[%s142 + $0x52] sm:$0xff] %vm562, 0.0
        %572 = vst.msk [vmem:[%s142 + $0x5a] sm:$0xff] %vm562, 0.0
        %573 = vst.msk [vmem:[%s142 + $0x62] sm:$0xff] %vm562, 0.0
        %574 = vst.msk [vmem:[%s142 + $0x6a] sm:$0xff] %vm562, 0.0
        %575 = vst.msk [vmem:[%s142 + $0x7a] sm:$0xff] %vm562, 0.0
        %576 = vst.msk [vmem:[%s142 + $0x82] sm:$0xff] %vm562, 0.0
        %577 = vst.msk [vmem:[%s142 + $0x8a] sm:$0xff] %vm562, 0.0
        %578 = vst.msk [vmem:[%s142 + $0x92] sm:$0xff] %vm562, 0.0
        %579 = vst.msk [vmem:[%s142 + $0xa2] sm:$0xff] %vm562, 0.0
        %580 = vst.msk [vmem:[%s142 + $0xaa] sm:$0xff] %vm562, 0.0
        %581 = vst.msk [vmem:[%s142 + $0xb2] sm:$0xff] %vm562, 0.0
        %582 = vst.msk [vmem:[%s142 + $0xba] sm:$0xff] %vm562, 0.0
        %583 = vst.msk [vmem:[%s142 + $0xca] sm:$0xff] %vm562, 0.0
        %584 = vst.msk [vmem:[%s142 + $0xd2] sm:$0xff] %vm562, 0.0
        %585 = vst.msk [vmem:[%s142 + $0xda] sm:$0xff] %vm562, 0.0
        %586 = vst.msk [vmem:[%s142 + $0xe2] sm:$0xff] %vm562, 0.0
        %587 = vst.msk [vmem:[%s142 + $0xf2] sm:$0xff] %vm562, 0.0
        %588 = vst.msk [vmem:[%s142 + $0xfa] sm:$0xff] %vm562, 0.0
        %589 = vst.msk [vmem:[%s142 + $0x102] sm:$0xff] %vm562, 0.0
        %590 = vst.msk [vmem:[%s142 + $0x10a] sm:$0xff] %vm562, 0.0
        %591 = vst.msk [vmem:[%s142 + $0x11a] sm:$0xff] %vm562, 0.0
        %592 = vst.msk [vmem:[%s142 + $0x122] sm:$0xff] %vm562, 0.0
        %593 = vst.msk [vmem:[%s142 + $0x12a] sm:$0xff] %vm562, 0.0
        %594 = vst.msk [vmem:[%s142 + $0x132] sm:$0xff] %vm562, 0.0
        %595 = vst.msk [vmem:[%s142 + $0x142] sm:$0xff] %vm562, 0.0
        %596 = vst.msk [vmem:[%s142 + $0x14a] sm:$0xff] %vm562, 0.0
        %597 = vst.msk [vmem:[%s142 + $0x152] sm:$0xff] %vm562, 0.0
        %598 = vst.msk [vmem:[%s142 + $0x15a] sm:$0xff] %vm562, 0.0
        %599 = vst.msk [vmem:[%s142 + $0x16a] sm:$0xff] %vm562, 0.0
        %600 = vst.msk [vmem:[%s142 + $0x172] sm:$0xff] %vm562, 0.0
        %601 = vst.msk [vmem:[%s142 + $0x17a] sm:$0xff] %vm562, 0.0
        %602 = vst.msk [vmem:[%s142 + $0x182] sm:$0xff] %vm562, 0.0
        %603 = vst.msk [vmem:[%s142 + $0x192] sm:$0xff] %vm562, 0.0
        %604 = vst.msk [vmem:[%s142 + $0x19a] sm:$0xff] %vm562, 0.0
        %605 = vst.msk [vmem:[%s142 + $0x1a2] sm:$0xff] %vm562, 0.0
        %606 = vst.msk [vmem:[%s142 + $0x1aa] sm:$0xff] %vm562, 0.0
        %607 = vst.msk [vmem:[%s142 + $0x1ba] sm:$0xff] %vm562, 0.0
        %608 = vst.msk [vmem:[%s142 + $0x1c2] sm:$0xff] %vm562, 0.0
        %609 = vst.msk [vmem:[%s142 + $0x1ca] sm:$0xff] %vm562, 0.0
        %610 = vst.msk [vmem:[%s142 + $0x1d2] sm:$0xff] %vm562, 0.0
        %611 = vst.msk [vmem:[%s142 + $0x1e2] sm:$0xff] %vm562, 0.0
        %612 = vst.msk [vmem:[%s142 + $0x1ea] sm:$0xff] %vm562, 0.0
        %613 = vst.msk [vmem:[%s142 + $0x1f2] sm:$0xff] %vm562, 0.0
        %614 = vst.msk [vmem:[%s142 + $0x1fa] sm:$0xff] %vm562, 0.0
        %615 = vst.msk [vmem:[%s142 + $0x20a] sm:$0xff] %vm562, 0.0
        %616 = vst.msk [vmem:[%s142 + $0x212] sm:$0xff] %vm562, 0.0
        %617 = vst.msk [vmem:[%s142 + $0x21a] sm:$0xff] %vm562, 0.0
        %618 = vst.msk [vmem:[%s142 + $0x222] sm:$0xff] %vm562, 0.0
        %619 = vst.msk [vmem:[%s142 + $0x232] sm:$0xff] %vm562, 0.0
        %620 = vst.msk [vmem:[%s142 + $0x23a] sm:$0xff] %vm562, 0.0
        %621 = vst.msk [vmem:[%s142 + $0x242] sm:$0xff] %vm562, 0.0
        %622 = vst.msk [vmem:[%s142 + $0x24a] sm:$0xff] %vm562, 0.0
        %623 = vst.msk [vmem:[%s142 + $0x25a] sm:$0xff] %vm562, 0.0
        %624 = vst.msk [vmem:[%s142 + $0x262] sm:$0xff] %vm562, 0.0
        %625 = vst.msk [vmem:[%s142 + $0x26a] sm:$0xff] %vm562, 0.0
        %626 = vst.msk [vmem:[%s142 + $0x272] sm:$0xff] %vm562, 0.0
        %vm627 = vcmask 294160
        %628 = vst.msk [vmem:[%s142 + $0x2] sm:$0xff] %vm627, 0.0
        %629 = vst.msk [vmem:[%s142 + $0xa] sm:$0xff] %vm627, 0.0
        %630 = vst.msk [vmem:[%s142 + $0x12] sm:$0xff] %vm627, 0.0
        %631 = vst.msk [vmem:[%s142 + $0x1a] sm:$0xff] %vm627, 0.0
        %632 = vst.msk [vmem:[%s142 + $0x2a] sm:$0xff] %vm627, 0.0
        %633 = vst.msk [vmem:[%s142 + $0x32] sm:$0xff] %vm627, 0.0
        %634 = vst.msk [vmem:[%s142 + $0x3a] sm:$0xff] %vm627, 0.0
        %635 = vst.msk [vmem:[%s142 + $0x42] sm:$0xff] %vm627, 0.0
        %636 = vst.msk [vmem:[%s142 + $0x52] sm:$0xff] %vm627, 0.0
        %637 = vst.msk [vmem:[%s142 + $0x5a] sm:$0xff] %vm627, 0.0
        %638 = vst.msk [vmem:[%s142 + $0x62] sm:$0xff] %vm627, 0.0
        %639 = vst.msk [vmem:[%s142 + $0x6a] sm:$0xff] %vm627, 0.0
        %640 = vst.msk [vmem:[%s142 + $0x7a] sm:$0xff] %vm627, 0.0
        %641 = vst.msk [vmem:[%s142 + $0x82] sm:$0xff] %vm627, 0.0
        %642 = vst.msk [vmem:[%s142 + $0x8a] sm:$0xff] %vm627, 0.0
        %643 = vst.msk [vmem:[%s142 + $0x92] sm:$0xff] %vm627, 0.0
        %644 = vst.msk [vmem:[%s142 + $0xa2] sm:$0xff] %vm627, 0.0
        %645 = vst.msk [vmem:[%s142 + $0xaa] sm:$0xff] %vm627, 0.0
        %646 = vst.msk [vmem:[%s142 + $0xb2] sm:$0xff] %vm627, 0.0
        %647 = vst.msk [vmem:[%s142 + $0xba] sm:$0xff] %vm627, 0.0
        %648 = vst.msk [vmem:[%s142 + $0xca] sm:$0xff] %vm627, 0.0
        %649 = vst.msk [vmem:[%s142 + $0xd2] sm:$0xff] %vm627, 0.0
        %650 = vst.msk [vmem:[%s142 + $0xda] sm:$0xff] %vm627, 0.0
        %651 = vst.msk [vmem:[%s142 + $0xe2] sm:$0xff] %vm627, 0.0
        %652 = vst.msk [vmem:[%s142 + $0xf2] sm:$0xff] %vm627, 0.0
        %653 = vst.msk [vmem:[%s142 + $0xfa] sm:$0xff] %vm627, 0.0
        %654 = vst.msk [vmem:[%s142 + $0x102] sm:$0xff] %vm627, 0.0
        %655 = vst.msk [vmem:[%s142 + $0x10a] sm:$0xff] %vm627, 0.0
        %656 = vst.msk [vmem:[%s142 + $0x11a] sm:$0xff] %vm627, 0.0
        %657 = vst.msk [vmem:[%s142 + $0x122] sm:$0xff] %vm627, 0.0
        %658 = vst.msk [vmem:[%s142 + $0x12a] sm:$0xff] %vm627, 0.0
        %659 = vst.msk [vmem:[%s142 + $0x132] sm:$0xff] %vm627, 0.0
        %660 = vst.msk [vmem:[%s142 + $0x142] sm:$0xff] %vm627, 0.0
        %661 = vst.msk [vmem:[%s142 + $0x14a] sm:$0xff] %vm627, 0.0
        %662 = vst.msk [vmem:[%s142 + $0x152] sm:$0xff] %vm627, 0.0
        %663 = vst.msk [vmem:[%s142 + $0x15a] sm:$0xff] %vm627, 0.0
        %664 = vst.msk [vmem:[%s142 + $0x16a] sm:$0xff] %vm627, 0.0
        %665 = vst.msk [vmem:[%s142 + $0x172] sm:$0xff] %vm627, 0.0
        %666 = vst.msk [vmem:[%s142 + $0x17a] sm:$0xff] %vm627, 0.0
        %667 = vst.msk [vmem:[%s142 + $0x182] sm:$0xff] %vm627, 0.0
        %668 = vst.msk [vmem:[%s142 + $0x192] sm:$0xff] %vm627, 0.0
        %669 = vst.msk [vmem:[%s142 + $0x19a] sm:$0xff] %vm627, 0.0
        %670 = vst.msk [vmem:[%s142 + $0x1a2] sm:$0xff] %vm627, 0.0
        %671 = vst.msk [vmem:[%s142 + $0x1aa] sm:$0xff] %vm627, 0.0
        %672 = vst.msk [vmem:[%s142 + $0x1ba] sm:$0xff] %vm627, 0.0
        %673 = vst.msk [vmem:[%s142 + $0x1c2] sm:$0xff] %vm627, 0.0
        %674 = vst.msk [vmem:[%s142 + $0x1ca] sm:$0xff] %vm627, 0.0
        %675 = vst.msk [vmem:[%s142 + $0x1d2] sm:$0xff] %vm627, 0.0
        %676 = vst.msk [vmem:[%s142 + $0x1e2] sm:$0xff] %vm627, 0.0
        %677 = vst.msk [vmem:[%s142 + $0x1ea] sm:$0xff] %vm627, 0.0
        %678 = vst.msk [vmem:[%s142 + $0x1f2] sm:$0xff] %vm627, 0.0
        %679 = vst.msk [vmem:[%s142 + $0x1fa] sm:$0xff] %vm627, 0.0
        %680 = vst.msk [vmem:[%s142 + $0x20a] sm:$0xff] %vm627, 0.0
        %681 = vst.msk [vmem:[%s142 + $0x212] sm:$0xff] %vm627, 0.0
        %682 = vst.msk [vmem:[%s142 + $0x21a] sm:$0xff] %vm627, 0.0
        %683 = vst.msk [vmem:[%s142 + $0x222] sm:$0xff] %vm627, 0.0
        %684 = vst.msk [vmem:[%s142 + $0x232] sm:$0xff] %vm627, 0.0
        %685 = vst.msk [vmem:[%s142 + $0x23a] sm:$0xff] %vm627, 0.0
        %686 = vst.msk [vmem:[%s142 + $0x242] sm:$0xff] %vm627, 0.0
        %687 = vst.msk [vmem:[%s142 + $0x24a] sm:$0xff] %vm627, 0.0
        %688 = vst.msk [vmem:[%s142 + $0x25a] sm:$0xff] %vm627, 0.0
        %689 = vst.msk [vmem:[%s142 + $0x262] sm:$0xff] %vm627, 0.0
        %690 = vst.msk [vmem:[%s142 + $0x26a] sm:$0xff] %vm627, 0.0
        %691 = vst.msk [vmem:[%s142 + $0x272] sm:$0xff] %vm627, 0.0
        %s692 = smul.u32 16, %s15
        %p693 = scmp.lt.s32.totalorder %s692, 31
        %s694 = scalar_select %p693, %s692, 31
        %s695 = smul.addr %s694, 5
        %s696 = smul.addr %s695, 8
        %s697 = scalar_lea.vmem %s1, %s696
        // Predicated region
        $region29: #{tpu_custom_call.1} parent=23 // pred_check
          %p698 = pneg %p59
        $region30: #{tpu_custom_call.1} parent=23 // pred_check_branch
          %700 = sbr.rel (%p698) target = $region32
        $region31: #{tpu_custom_call.1} parent=23 // pred_region
          %s701 = smul.u32 16, %s15
        $region32: #{tpu_custom_call.1} parent=23 // pred_fallthru
          _
      $region24: #{tpu_custom_call.1} parent=5 // pred_fallthru
        _
      %p702 = scmp.le.s32.totalorder 2, %s10
      // Predicated region
      $region33: #{tpu_custom_call.1} parent=5 // pred_check
        %p703 = pneg %p702
      $region34: #{tpu_custom_call.1} parent=5 // pred_check_branch
        %705 = sbr.rel (%p703) target = $region36
      $region35: #{tpu_custom_call.1} parent=5 // pred_region
        %s706 = ssub.s32 %s10, 2
        // Predicated region
        $region37: #{tpu_custom_call.1} parent=35 // pred_check
          %p707 = pneg %p65
        $region38: #{tpu_custom_call.1} parent=35 // pred_check_branch
          %709 = sbr.rel (%p707) target = $region40
        $region39: #{tpu_custom_call.1} parent=35 // pred_region
          %s710 = smul.u32 16, %s16
          %p711 = scmp.lt.s32.totalorder %s710, 31
          %s712 = scalar_select %p711, %s710, 31
          %s713 = smul.addr %s712, 5
          %s714 = smul.addr %s713, 8
          %s715 = scalar_lea.vmem %s1, %s714
        $region40: #{tpu_custom_call.1} parent=35 // pred_fallthru
          _
      $region36: #{tpu_custom_call.1} parent=5 // pred_fallthru
        _
    $region6: #{tpu_custom_call.1} parent=1 // loop_footer
      %s14 = sadd.s32 1, %s10
    $region7: #{tpu_custom_call.1} parent=1 // loop_footer_branch
      %9 = sbr.rel target = $region3
    $region8: #{tpu_custom_call.1} parent=1 // loop_exit
      _
    %716 = vsyncpa [#allocation3], 1
    %s717 = scalar_lea.sflag [#allocation3], 1
    %718 = vsyncpa %s717, 1

</llo_original>
